<compile_context>
chip_gen: v6e
topology: v6e:2x2x1
jax: 0.10.0
libtpu: 0.0.40
codegen_flags: <defaults>
</compile_context>

<pallas_src>
import numpy as np
import jax
import jax.numpy as jnp
from jax.experimental import pallas as pl
from jax.experimental.pallas import tpu as pltpu

MID = 512           # stage conv output channels (hard-coded in PSPModule)
BN_EPS = 1e-5


def _round_up(x, m):
    return ((x + m - 1) // m) * m


# ------------------------------------------------------------------
# host-side construction of pooling / bilinear-upsample matrices
# ------------------------------------------------------------------
def _adaptive_pool_matrix(in_size, out_size):
    """P[i, h] such that pooled[i] = sum_h P[i, h] * x[h]  (PyTorch AdaptiveAvgPool)."""
    P = np.zeros((out_size, in_size), np.float32)
    for i in range(out_size):
        start = (i * in_size) // out_size
        end = -(-((i + 1) * in_size) // out_size)   # ceil
        P[i, start:end] = 1.0 / (end - start)
    return P


def _bilinear_up_matrix(out_size, in_size):
    """U[o, i]: up[o] = sum_i U[o, i] * y[i]  (F.interpolate bilinear, align_corners=False)."""
    U = np.zeros((out_size, in_size), np.float32)
    scale = in_size / out_size
    for o in range(out_size):
        src = (o + 0.5) * scale - 0.5
        src = max(src, 0.0)
        i0 = min(int(np.floor(src)), in_size - 1)
        i1 = i0 + 1 if i0 < in_size - 1 else i0
        w1 = src - i0
        U[o, i0] += 1.0 - w1
        U[o, i1] += w1
    return U


# ------------------------------------------------------------------
# per-generation VMEM budget and HW tile selection
# ------------------------------------------------------------------
def _vmem_budget():
    """~80% of physical VMEM, capped at 100 MiB (v5e/v6e: ~100 MiB, v7x: ~51 MiB)."""
    cap = None
    try:
        cap = pltpu.get_tpu_info().vmem_capacity_bytes
    except Exception:
        cap = None
    if not cap:
        cap = 64 * 1024 * 1024
    return int(min(int(cap * 0.8), 100 * 1024 * 1024))


def _pick_hw_tile(HW, vmem_budget, hw_tile=None):
    """HW tile (multiple of 128) and the zero-padded HW extent (multiple of the tile)."""
    if hw_tile is not None:
        t = max(128, _round_up(hw_tile, 128))
    else:
        target = 2048 if vmem_budget >= 96 * 1024 * 1024 else 1024
        t = min(target, _round_up(HW, 128))
    HW_pad = _round_up(HW, t)
    return t, HW_pad


def _resident_spec(shape, index_map):
    """Single-buffered BlockSpec for grid-invariant operands (halves their VMEM)."""
    try:
        return pl.BlockSpec(shape, index_map, pipeline_mode=pl.Buffered(1))
    except TypeError:   # older BlockSpec without pipeline_mode kwarg
        return pl.BlockSpec(shape, index_map)


# ------------------------------------------------------------------
# fold BN scales into weights, concatenate + pad pool / upsample matrices
# ------------------------------------------------------------------
def _prepare(params, H, W, pool_sizes, HW_pad):
    n_stages = len(pool_sizes)
    C = params["bottleneck"]["w"].shape[1]          # in_channels
    HW = H * W
    s2_sizes = [s * s for s in pool_sizes]
    s2_tot = sum(s2_sizes)
    s2_pad = ((s2_tot + 15) // 16) * 16             # sublane-friendly padding

    # Pool / upsample matrices, concatenated across stages, zero-padded on both the
    # stage axis (to s2_pad) and the HW axis (to HW_pad).
    P_rows, U_cols, row_stage = [], [], []
    for si, s in enumerate(pool_sizes):
        Ph, Pw = _adaptive_pool_matrix(H, s), _adaptive_pool_matrix(W, s)
        Uh, Uw = _bilinear_up_matrix(H, s), _bilinear_up_matrix(W, s)
        P_rows.append(np.kron(Ph, Pw))              # (s2, H*W)
        U_cols.append(np.kron(Uh, Uw))              # (H*W, s2)
        row_stage.extend([si] * (s * s))
    P_cat = np.concatenate(P_rows, axis=0)          # (s2_tot, HW)
    U_cat = np.concatenate(U_cols, axis=1)          # (HW, s2_tot)
    P_cat = np.pad(P_cat, ((0, s2_pad - s2_tot), (0, HW_pad - HW)))
    U_cat = np.pad(U_cat, ((0, HW_pad - HW), (0, s2_pad - s2_tot)))
    # Stage id per pooled row (-1 for padding rows -> masked to zero in the kernel).
    row_stage = np.asarray(row_stage + [-1] * (s2_pad - s2_tot),
                           np.float32).reshape(s2_pad, 1)

    # Stage 1x1 convs with BN scale folded; concatenated along output channels.
    W_cat = jnp.concatenate([st["w"] * st["scale"] for st in params["stages"]], axis=1)   # (C, n*MID)
    shift_cat = jnp.concatenate([st["shift"] for st in params["stages"]], axis=1)         # (1, n*MID)

    # Bottleneck 1x1 conv with BN scale folded, split into x-block and pyramid-block.
    bn = params["bottleneck"]
    wb = bn["w"] * bn["scale"]                      # (C + n*MID, C)
    Wb_x = wb[:C]                                   # (C, C)
    Wb_pyr = wb[C:]                                 # (n*MID, C)

    bf16 = jnp.bfloat16
    return {
        "P": jnp.asarray(P_cat).astype(bf16),
        "U": jnp.asarray(U_cat).astype(bf16),
        "row_stage": jnp.asarray(row_stage),
        "W_cat": W_cat.astype(bf16),
        "shift_cat": shift_cat.astype(jnp.float32),
        "Wb_x": Wb_x.astype(bf16),
        "Wb_pyr": Wb_pyr.astype(bf16),
        "shift_b": bn["shift"].astype(jnp.float32),
        "s2_sizes": s2_sizes,
        "s2_pad": s2_pad,
        "n_stages": n_stages,
    }


# ------------------------------------------------------------------
# Pallas kernels
# ------------------------------------------------------------------
def _pool_kernel(x_ref, p_ref, pooled_ref):
    """All-stage adaptive average pooling as an HW-tiled reduction.

    x_ref:      (1, hw_t, C) bf16
    p_ref:      (S2p, hw_t)  bf16  (concatenated adaptive-pool matrix tile)
    pooled_ref: (1, S2p, C)  f32   resident output accumulator (same block for all t)
    """
    t = pl.program_id(1)

    @pl.when(t == 0)
    def _():
        pooled_ref[...] = jnp.zeros_like(pooled_ref)

    pooled_ref[0] += jnp.dot(p_ref[...], x_ref[0], preferred_element_type=jnp.float32)


def _stage_epilogue_kernel(pooled_ref, wcat_ref, shiftc_ref, rowstage_ref, wbp_ref, z_ref):
    """Stage convs + BN + ReLU + block selection, folded into the bottleneck's pyramid rows.

    pooled_ref:   (1, S2p, C) f32     wcat_ref: (C, n*MID) bf16 (scale folded)
    shiftc_ref:   (1, n*MID)  f32     rowstage_ref: (S2p, 1) f32 (stage id, -1 = pad)
    wbp_ref:      (n*MID, C)  bf16    z_ref: (1, S2p, C) bf16
    """
    y = jnp.dot(pooled_ref[0].astype(jnp.bfloat16), wcat_ref[...],
                preferred_element_type=jnp.float32)
    y = jnp.maximum(y + shiftc_ref[...], 0.0)
    # Block-diagonal stage selection built from an iota compare (no streamed mask).
    n_mid = wcat_ref.shape[1]
    col_stage = (jax.lax.broadcasted_iota(jnp.int32, (1, n_mid), 1) // MID
                 ).astype(jnp.float32)
    y = jnp.where(rowstage_ref[...] == col_stage, y, 0.0)
    z_ref[0] = jnp.dot(y.astype(jnp.bfloat16), wbp_ref[...],
                       preferred_element_type=jnp.float32).astype(z_ref.dtype)


def _bottleneck_kernel(x_ref, u_ref, z_ref, wbx_ref, shiftb_ref, o_ref):
    """Bottleneck with fused upsample + concat:  out = ReLU(x @ Wb_x + U @ Z + shift_b).

    x_ref: (1, hw_t, C) bf16   u_ref: (hw_t, S2p) bf16   z_ref: (1, S2p, C) bf16
    wbx_ref: (C, C) bf16 (scale folded)   shiftb_ref: (1, C) f32   o_ref: (1, hw_t, C) bf16
    """
    acc = jnp.dot(x_ref[0], wbx_ref[...], preferred_element_type=jnp.float32)
    acc += jnp.dot(u_ref[...], z_ref[0], preferred_element_type=jnp.float32)
    o_ref[0] = jnp.maximum(acc + shiftb_ref[...], 0.0).astype(o_ref.dtype)
    # Dropout(0.3) is identity in eval mode.


# ------------------------------------------------------------------
# pallas_call wrappers
# ------------------------------------------------------------------
def _run_pool(x_flat, prep, hw_t, vmem_limit):
    N, HW_pad, C = x_flat.shape
    S2p = prep["s2_pad"]
    n_t = HW_pad // hw_t
    flops = 2 * N * HW_pad * S2p * C
    bytes_accessed = N * HW_pad * C * 2 + S2p * HW_pad * 2 + N * S2p * C * 4
    return pl.pallas_call(
        _pool_kernel,
        out_shape=jax.ShapeDtypeStruct((N, S2p, C), jnp.float32),
        grid=(N, n_t),
        in_specs=[
            pl.BlockSpec((1, hw_t, C), lambda n, t: (n, t, 0)),
            pl.BlockSpec((S2p, hw_t), lambda n, t: (0, t)),
        ],
        out_specs=pl.BlockSpec((1, S2p, C), lambda n, t: (n, 0, 0)),
        compiler_params=pltpu.CompilerParams(
            dimension_semantics=("parallel", "arbitrary"),
            vmem_limit_bytes=vmem_limit),
        cost_estimate=pl.CostEstimate(flops=flops, transcendentals=0,
                                      bytes_accessed=bytes_accessed),
    )(x_flat, prep["P"])


def _run_stage_epilogue(pooled, prep, vmem_limit):
    N, S2p, C = pooled.shape
    n_mid = prep["W_cat"].shape[1]
    flops = 4 * N * S2p * C * n_mid
    bytes_accessed = (N * S2p * C * 4 + C * n_mid * 2 + n_mid * C * 2
                      + N * S2p * C * 2 + n_mid * 4 + S2p * 4)
    return pl.pallas_call(
        _stage_epilogue_kernel,
        out_shape=jax.ShapeDtypeStruct((N, S2p, C), jnp.bfloat16),
        grid=(N,),
        in_specs=[
            pl.BlockSpec((1, S2p, C), lambda n: (n, 0, 0)),
            _resident_spec((C, n_mid), lambda n: (0, 0)),
            _resident_spec((1, n_mid), lambda n: (0, 0)),
            _resident_spec((S2p, 1), lambda n: (0, 0)),
            _resident_spec((n_mid, C), lambda n: (0, 0)),
        ],
        out_specs=pl.BlockSpec((1, S2p, C), lambda n: (n, 0, 0)),
        compiler_params=pltpu.CompilerParams(
            dimension_semantics=("parallel",),
            vmem_limit_bytes=vmem_limit),
        cost_estimate=pl.CostEstimate(flops=flops, transcendentals=0,
                                      bytes_accessed=bytes_accessed),
    )(pooled, prep["W_cat"], prep["shift_cat"], prep["row_stage"], prep["Wb_pyr"])


def _run_bottleneck(x_flat, z, prep, hw_t, vmem_limit):
    N, HW_pad, C = x_flat.shape
    S2p = prep["s2_pad"]
    n_t = HW_pad // hw_t
    flops = 2 * N * HW_pad * C * C + 2 * N * HW_pad * S2p * C
    bytes_accessed = (N * HW_pad * C * 2 * 2 + HW_pad * S2p * 2
                      + N * S2p * C * 2 + C * C * 2 + C * 4)
    return pl.pallas_call(
        _bottleneck_kernel,
        out_shape=jax.ShapeDtypeStruct((N, HW_pad, C), jnp.bfloat16),
        grid=(N, n_t),
        in_specs=[
            pl.BlockSpec((1, hw_t, C), lambda n, t: (n, t, 0)),
            pl.BlockSpec((hw_t, S2p), lambda n, t: (t, 0)),
            pl.BlockSpec((1, S2p, C), lambda n, t: (n, 0, 0)),
            _resident_spec((C, C), lambda n, t: (0, 0)),
            _resident_spec((1, C), lambda n, t: (0, 0)),
        ],
        out_specs=pl.BlockSpec((1, hw_t, C), lambda n, t: (n, t, 0)),
        compiler_params=pltpu.CompilerParams(
            dimension_semantics=("parallel", "parallel"),
            vmem_limit_bytes=vmem_limit),
        cost_estimate=pl.CostEstimate(flops=flops, transcendentals=0,
                                      bytes_accessed=bytes_accessed),
    )(x_flat, prep["U"], z, prep["Wb_x"], prep["shift_b"])


# ------------------------------------------------------------------
# parameter init (deterministic, synthetic) + forward
# ------------------------------------------------------------------
def _bn_scale_shift(key, channels):
    k1, k2, k3, k4 = jax.random.split(key, 4)
    gamma = 1.0 + 0.1 * jax.random.normal(k1, (channels,), jnp.float32)
    beta = 0.1 * jax.random.normal(k2, (channels,), jnp.float32)
    mean = 0.1 * jax.random.normal(k3, (channels,), jnp.float32)
    var = 1.0 + 0.1 * jax.random.uniform(k4, (channels,), jnp.float32)
    scale = gamma / jnp.sqrt(var + BN_EPS)
    shift = beta - mean * scale
    return scale.reshape(1, channels), shift.reshape(1, channels)


def init_psp_params(key, in_channels, pool_sizes):
    n_stages = len(pool_sizes)
    keys = jax.random.split(key, 2 * n_stages + 2)
    stages = []
    for i in range(n_stages):
        w = jax.random.normal(keys[2 * i], (in_channels, MID), jnp.float32) / np.sqrt(in_channels)
        scale, shift = _bn_scale_shift(keys[2 * i + 1], MID)
        stages.append({"w": w, "scale": scale, "shift": shift})
    c_tot = in_channels + n_stages * MID
    wb = jax.random.normal(keys[-2], (c_tot, in_channels), jnp.float32) / np.sqrt(c_tot)
    scale_b, shift_b = _bn_scale_shift(keys[-1], in_channels)
    return {"stages": stages, "bottleneck": {"w": wb, "scale": scale_b, "shift": shift_b}}


def psp_forward(params, x_nchw, pool_sizes, hw_tile=None):
    """PSPModule forward. Returns NCHW bf16 (cast to f32 on host if required downstream)."""
    N, C, H, W = x_nchw.shape
    HW = H * W
    vmem_limit = _vmem_budget()
    hw_t, HW_pad = _pick_hw_tile(HW, vmem_limit, hw_tile)
    prep = _prepare(params, H, W, pool_sizes, HW_pad)

    # Pixels-major, channels-last layout; cast matmul operands to bf16 once;
    # zero-pad HW to a multiple of the tile (padded P cols / U rows are zero).
    x_flat = jnp.transpose(x_nchw, (0, 2, 3, 1)).reshape(N, HW, C).astype(jnp.bfloat16)
    if HW_pad != HW:
        x_flat = jnp.pad(x_flat, ((0, 0), (0, HW_pad - HW), (0, 0)))

    pooled = _run_pool(x_flat, prep, hw_t, vmem_limit)           # (N, S2p, C) f32
    z = _run_stage_epilogue(pooled, prep, vmem_limit)            # (N, S2p, C) bf16
    out_flat = _run_bottleneck(x_flat, z, prep, hw_t, vmem_limit)  # (N, HW_pad, C) bf16
    out_flat = out_flat[:, :HW, :]
    return jnp.transpose(out_flat.reshape(N, H, W, C), (0, 3, 1, 2))   # back to NCHW


# ------------------------------------------------------------------
# plain-JAX reference in the ORIGINAL (unfused) order: pool -> conv/BN/ReLU ->
# upsample -> concat -> bottleneck conv/BN/ReLU.  Uses the same bf16-cast,
# scale-folded operands, so it validates the kernels' algebraic fusion.
# (A one-off f32 comparison at real shapes is still advisable for absolute error.)
# ------------------------------------------------------------------
def psp_reference(params, x_nchw, pool_sizes):
    N, C, H, W = x_nchw.shape
    HW = H * W
    prep = _prepare(params, H, W, pool_sizes, HW)   # no HW padding in the reference
    bf16 = jnp.bfloat16
    x = jnp.transpose(x_nchw, (0, 2, 3, 1)).reshape(N, HW, C).astype(bf16)

    pyramids = [x.astype(jnp.float32)]
    off = 0
    for si, s2 in enumerate(prep["s2_sizes"]):
        Ps = prep["P"][off:off + s2]                   # (s2, HW)
        Us = prep["U"][:, off:off + s2]                # (HW, s2)
        Wc = prep["W_cat"][:, si * MID:(si + 1) * MID]
        sh = prep["shift_cat"][:, si * MID:(si + 1) * MID]
        pooled = jnp.einsum("sp,npc->nsc", Ps, x, preferred_element_type=jnp.float32)
        y = jnp.maximum(
            jnp.einsum("nsc,cm->nsm", pooled.astype(bf16), Wc,
                       preferred_element_type=jnp.float32) + sh, 0.0)
        up = jnp.einsum("ps,nsm->npm", Us, y.astype(bf16),
                        preferred_element_type=jnp.float32)
        pyramids.append(up)
        off += s2

    feat = jnp.concatenate(pyramids, axis=-1)          # (N, HW, C + n*MID)
    wb_full = jnp.concatenate([prep["Wb_x"], prep["Wb_pyr"]], axis=0)
    out = jnp.maximum(
        jnp.einsum("npk,kc->npc", feat.astype(bf16), wb_full,
                   preferred_element_type=jnp.float32) + prep["shift_b"], 0.0)
    return jnp.transpose(out.reshape(N, H, W, C), (0, 3, 1, 2))


if __name__ == "__main__":
    pool_sizes = [1, 2, 3, 6]

    # Test 1: toy PSP shapes, single HW tile (no padding path).
    N, C, H, W = 2, 4, 16, 16
    kx, kp = jax.random.split(jax.random.PRNGKey(0))
    x = jax.random.normal(kx, (N, C, H, W), dtype=jnp.float32)
    params = init_psp_params(kp, C, pool_sizes)
    out = jax.block_until_ready(psp_forward(params, x, pool_sizes))
    assert out.shape == (N, C, H, W), out.shape
    ref = jax.block_until_ready(psp_reference(params, x, pool_sizes))
    np.testing.assert_allclose(np.asarray(out.astype(jnp.float32)),
                               np.asarray(ref), rtol=2e-2, atol=2e-2)

    # Test 2: HW = 16*20 = 320 (not a multiple of 128) with a forced 128 tile ->
    # exercises the zero-padded, multi-tile pooling reduction and output slicing.
    N2, C2, H2, W2 = 1, 8, 16, 20
    kx2, kp2 = jax.random.split(jax.random.PRNGKey(1))
    x2 = jax.random.normal(kx2, (N2, C2, H2, W2), dtype=jnp.float32)
    params2 = init_psp_params(kp2, C2, pool_sizes)
    out2 = jax.block_until_ready(psp_forward(params2, x2, pool_sizes, hw_tile=128))
    ref2 = jax.block_until_ready(psp_reference(params2, x2, pool_sizes))
    np.testing.assert_allclose(np.asarray(out2.astype(jnp.float32)),
                               np.asarray(ref2), rtol=2e-2, atol=2e-2)

    print("KERNEL_OK")
</pallas_src>

<mosaic_0001>
module attributes {stable_mosaic.version = 11 : i64} {
  func.func @_pool_kernel(%arg0: i32, %arg1: i32, %arg2: memref<1x256x4xbf16, #tpu.memory_space<vmem>>, %arg3: memref<64x256xbf16, #tpu.memory_space<vmem>>, %arg4: memref<1x64x4xf32, #tpu.memory_space<vmem>>) attributes {dimension_semantics = [#tpu.dimension_semantics<parallel>, #tpu.dimension_semantics<arbitrary>], iteration_bounds = array<i64: 2, 1>, scalar_prefetch = 0 : i64, scratch_operands = 0 : i64, tpu.core_type = #tpu.core_type<tc>, window_params = [{transform_indices = @transform_0, window_bounds = array<i64: 1, 256, 4>}, {transform_indices = @transform_1, window_bounds = array<i64: 64, 256>}, {transform_indices = @transform_2, window_bounds = array<i64: 1, 64, 4>}]} {
    %c0_i32 = arith.constant 0 : i32
    %0 = arith.cmpi eq, %arg1, %c0_i32 : i32
    %1 = arith.extui %0 : i1 to i32
    %c0_i32_0 = arith.constant 0 : i32
    %2 = arith.cmpi ne, %1, %c0_i32_0 : i32
    scf.if %2 {
      %cst_11 = arith.constant 0.000000e+00 : f32
      %13 = vector.broadcast %cst_11 : f32 to vector<1x64x4xf32>
      %c0_12 = arith.constant 0 : index
      %c0_13 = arith.constant 0 : index
      %c0_14 = arith.constant 0 : index
      %14 = vector.load %arg4[%c0_12, %c0_13, %c0_14] : memref<1x64x4xf32, #tpu.memory_space<vmem>>, vector<1x64x4xf32>
      tpu.vector_store %arg4[%c0_12, %c0_13, %c0_14], %13 {strides = array<i32>} : memref<1x64x4xf32, #tpu.memory_space<vmem>>, vector<1x64x4xf32>,
    } else {
    }
    %c0 = arith.constant 0 : index
    %c0_1 = arith.constant 0 : index
    %c0_2 = arith.constant 0 : index
    %3 = vector.load %arg4[%c0, %c0_1, %c0_2] : memref<1x64x4xf32, #tpu.memory_space<vmem>>, vector<1x64x4xf32>
    %4 = vector.shape_cast %3 : vector<1x64x4xf32> to vector<64x4xf32>
    %c0_3 = arith.constant 0 : index
    %c0_4 = arith.constant 0 : index
    %5 = vector.load %arg3[%c0_3, %c0_4] : memref<64x256xbf16, #tpu.memory_space<vmem>>, vector<64x256xbf16>
    %c0_5 = arith.constant 0 : index
    %c0_6 = arith.constant 0 : index
    %c0_7 = arith.constant 0 : index
    %6 = vector.load %arg2[%c0_5, %c0_6, %c0_7] : memref<1x256x4xbf16, #tpu.memory_space<vmem>>, vector<1x256x4xbf16>
    %7 = vector.shape_cast %6 : vector<1x256x4xbf16> to vector<256x4xbf16>
    %cst = arith.constant dense<0.000000e+00> : vector<64x4xf32>
    %8 = tpu.matmul %5, %7, %cst {dimension_numbers = #tpu.dot_dimension_numbers<[1], [0], [0], [1], [0, 0, 1, 1], [], []>} : vector<64x256xbf16>, vector<256x4xbf16>, vector<64x4xf32> -> vector<64x4xf32>
    %9 = arith.addf %4, %8 : vector<64x4xf32>
    %c0_8 = arith.constant 0 : index
    %c0_9 = arith.constant 0 : index
    %c0_10 = arith.constant 0 : index
    %10 = vector.load %arg4[%c0_8, %c0_9, %c0_10] : memref<1x64x4xf32, #tpu.memory_space<vmem>>, vector<1x64x4xf32>
    %11 = vector.shape_cast %10 : vector<1x64x4xf32> to vector<64x4xf32>
    %12 = vector.shape_cast %9 : vector<64x4xf32> to vector<1x64x4xf32>
    tpu.vector_store %arg4[%c0_8, %c0_9, %c0_10], %12 {strides = array<i32>} : memref<1x64x4xf32, #tpu.memory_space<vmem>>, vector<1x64x4xf32>,
    return
  }
  func.func @transform_0(%arg0: i32, %arg1: i32) -> (i32, i32, i32) {
    %c0_i32 = arith.constant 0 : i32
    %c0_i32_0 = arith.constant 0 : i32
    return %arg0, %arg1, %c0_i32 : i32, i32, i32
  }
  func.func @transform_1(%arg0: i32, %arg1: i32) -> (i32, i32) {
    %c0_i32 = arith.constant 0 : i32
    %c0_i32_0 = arith.constant 0 : i32
    return %c0_i32, %arg1 : i32, i32
  }
  func.func @transform_2(%arg0: i32, %arg1: i32) -> (i32, i32, i32) {
    %c0_i32 = arith.constant 0 : i32
    %c0_i32_0 = arith.constant 0 : i32
    %c0_i32_1 = arith.constant 0 : i32
    return %arg0, %c0_i32, %c0_i32_0 : i32, i32, i32
  }
}

</mosaic_0001>

<llo_original>
// kernel: tpu_custom_call.1
$region0: #{tpu_custom_call.1}
  #allocation0 [shape = 'u32[]', space=smem, size = 0x4, offset = 0x4, fixed_abs, tag = 'smem constant byte address 0x4 - core index']
  #allocation1 [shape = 'u32[144,128]{1,0:T(1,128)}', space=vmem, size = 0x12000, scoped, tag = 'internal scratch']
  %s0 = inlined_call_operand.vmem [shape: bf16[2,256,4], index: 0, kind: input, shape index: {}]
  %s1 = inlined_call_operand.vmem [shape: bf16[64,256], index: 1, kind: input, shape index: {}]
  %s2 = inlined_call_operand.vmem [shape: f32[2,64,4], index: 2, kind: output, shape index: {}]
  %s3 = sld [smem:[#allocation0]]
  $region45: #{tpu_custom_call.1} parent=0
    _
  %s5 = ssub.s32 1, %s3
  %s6 = scalar_select 0, %s5, %s3
  loop: start=0, step=1, limit=4
  $region2: #{tpu_custom_call.1} parent=0 // loop_pre_header
    _
  $region3: #{tpu_custom_call.1} parent=0 // loop_header
    %s8 = sphi 0, %s12
    %p9 = scmp.ge.s32.totalorder %s8, 4
    %s15 = sphi 0, %s27
    %s16 = sphi 0, %s23
    %s17 = sphi 0, %s15
    %s18 = sphi 0, %s16
    %s19 = sphi 0, %s17
    %s20 = sphi 0, %s18
    %s32 = sphi 0, %s34
    %s35 = sphi 0, %s32
    %s36 = sphi 0, %s35
    %s52 = sphi 0, %s36
    %s58 = sphi 0, %s60
    %s61 = sphi 0, %s58
    %s62 = sphi 0, %s61
    %s78 = sphi 0, %s62
    %s84 = sphi 0, %s86
    %s87 = sphi 0, %s84
    %s88 = sphi 0, %s87
    %s104 = sphi 0, %s88
  $region4: #{tpu_custom_call.1} parent=0 // loop_header_branch
    %11 = sbr.rel (%p9) target = $region8
  $region5: #{tpu_custom_call.1} parent=0 // loop_body
    %s13 = ssub.s32 %s8, 1
    %s14 = ssub.s32 %s8, 2
    %s21 = sadd.s32 1, %s16
    %p22 = scmp.ge.s32.totalorder %s21, 1
    %s23 = scalar_select %p22, 0, %s21
    %s24 = sadd.s32 1, %s15
    %s25 = scalar_select %p22, %s24, %s15
    %p26 = scmp.ge.s32.totalorder %s25, 2
    %s27 = scalar_select %p26, 0, %s25
    %s28 = ssub.s32 %s15, %s27
    %s29 = ssub.s32 %s16, %s23
    %s30 = sor.u32 %s28, %s29
    %p31 = scmp.eq.s32.totalorder %s30, 0
    %s33 = sadd.s32 %s32, 1
    %s34 = scalar_select %p31, %s32, %s33
    %p37 = pneg %p31
    %p38 = scmp.eq.s32.totalorder %s8, 1
    %p39 = por %p37, %p38
    %p40 = scmp.ne.s32.totalorder %s32, %s35
    %p41 = scmp.eq.s32.totalorder %s8, 0
    %p42 = por %p40, %p41
    %p43 = scmp.ne.s32.totalorder %s32, %s35
    %p44 = scmp.eq.s32.totalorder %s13, 1
    %p45 = por %p43, %p44
    %p46 = scmp.ne.s32.totalorder %s35, %s36
    %p47 = scmp.eq.s32.totalorder %s13, 0
    %p48 = por %p46, %p47
    %p49 = scmp.ne.s32.totalorder %s35, %s36
    %p50 = scmp.eq.s32.totalorder %s14, 1
    %p51 = por %p49, %p50
    %p53 = scmp.ne.s32.totalorder %s36, %s52
    %p54 = scmp.eq.s32.totalorder %s14, 0
    %p55 = por %p53, %p54
    %s56 = ssub.s32 %s16, %s23
    %p57 = scmp.eq.s32.totalorder %s56, 0
    %s59 = sadd.s32 %s58, 1
    %s60 = scalar_select %p57, %s58, %s59
    %p63 = pneg %p57
    %p64 = scmp.eq.s32.totalorder %s8, 1
    %p65 = por %p63, %p64
    %p66 = scmp.ne.s32.totalorder %s58, %s61
    %p67 = scmp.eq.s32.totalorder %s8, 0
    %p68 = por %p66, %p67
    %p69 = scmp.ne.s32.totalorder %s58, %s61
    %p70 = scmp.eq.s32.totalorder %s13, 1
    %p71 = por %p69, %p70
    %p72 = scmp.ne.s32.totalorder %s61, %s62
    %p73 = scmp.eq.s32.totalorder %s13, 0
    %p74 = por %p72, %p73
    %p75 = scmp.ne.s32.totalorder %s61, %s62
    %p76 = scmp.eq.s32.totalorder %s14, 1
    %p77 = por %p75, %p76
    %p79 = scmp.ne.s32.totalorder %s62, %s78
    %p80 = scmp.eq.s32.totalorder %s14, 0
    %p81 = por %p79, %p80
    %s82 = ssub.s32 %s15, %s27
    %p83 = scmp.eq.s32.totalorder %s82, 0
    %s85 = sadd.s32 %s84, 1
    %s86 = scalar_select %p83, %s84, %s85
    %p89 = pneg %p83
    %p90 = scmp.eq.s32.totalorder %s8, 1
    %p91 = por %p89, %p90
    %p92 = scmp.ne.s32.totalorder %s84, %s87
    %p93 = scmp.eq.s32.totalorder %s8, 0
    %p94 = por %p92, %p93
    %p95 = scmp.ne.s32.totalorder %s84, %s87
    %p96 = scmp.eq.s32.totalorder %s13, 1
    %p97 = por %p95, %p96
    %p98 = scmp.ne.s32.totalorder %s87, %s88
    %p99 = scmp.eq.s32.totalorder %s13, 0
    %p100 = por %p98, %p99
    %p101 = scmp.ne.s32.totalorder %s87, %s88
    %p102 = scmp.eq.s32.totalorder %s14, 1
    %p103 = por %p101, %p102
    %p105 = scmp.ne.s32.totalorder %s88, %s104
    %p106 = scmp.eq.s32.totalorder %s14, 0
    %p107 = por %p105, %p106
    %p108 = scmp.le.s32.totalorder 1, %s8
    %p109 = scmp.lt.s32.totalorder %s8, 3
    %p110 = pnand %p108, %p109
    %p111 = pneg %p110
    // Predicated region
    $region9: #{tpu_custom_call.1} parent=5 // pred_check
      _
    $region10: #{tpu_custom_call.1} parent=5 // pred_check_branch
      %113 = sbr.rel (%p110) target = $region12
    $region11: #{tpu_custom_call.1} parent=5 // pred_region
      %s114 = ssub.s32 %s8, 1
      // Predicated region
      $region13: #{tpu_custom_call.1} parent=11 // pred_check
        %p115 = pneg %p74
      $region14: #{tpu_custom_call.1} parent=11 // pred_check_branch
        %117 = sbr.rel (%p115) target = $region16
      $region15: #{tpu_custom_call.1} parent=11 // pred_region
        %s118 = smul.u32 2, %s18
        %p119 = scmp.lt.s32.totalorder %s118, 1
        %s120 = scalar_select %p119, %s118, 1
        %s121 = smul.addr %s120, 4
        %s122 = scalar_lea.vmem %s1, %s121
        %s123 = smul.u32 2, %s18
      $region16: #{tpu_custom_call.1} parent=11 // pred_fallthru
        _
    $region12: #{tpu_custom_call.1} parent=5 // pred_fallthru
      _
    %p124 = scmp.lt.s32.totalorder %s8, 2
    // Predicated region
    $region17: #{tpu_custom_call.1} parent=5 // pred_check
      %p125 = pneg %p124
    $region18: #{tpu_custom_call.1} parent=5 // pred_check_branch
      %127 = sbr.rel (%p125) target = $region20
    $region19: #{tpu_custom_call.1} parent=5 // pred_region
      // Predicated region
      $region21: #{tpu_custom_call.1} parent=19 // pred_check
        %p128 = pneg %p42
      $region22: #{tpu_custom_call.1} parent=19 // pred_check_branch
        %130 = sbr.rel (%p128) target = $region24
      $region23: #{tpu_custom_call.1} parent=19 // pred_region
        %s131 = smul.u32 32, %s16
        %p132 = scmp.lt.s32.totalorder %s15, 1
        %s133 = scalar_select %p132, %s15, 1
        %p134 = scmp.lt.s32.totalorder %s131, 31
        %s135 = scalar_select %p134, %s131, 31
        %s136 = smul.addr %s133, 32
        %s137 = sadd.s32 %s135, %s136
        %s138 = smul.addr %s137, 4
        %s139 = scalar_lea.vmem %s0, %s138
        %s140 = smul.u32 32, %s16
      $region24: #{tpu_custom_call.1} parent=19 // pred_fallthru
        _
    $region20: #{tpu_custom_call.1} parent=5 // pred_fallthru
      _
    %p141 = scmp.le.s32.totalorder 1, %s8
    %p142 = scmp.lt.s32.totalorder %s8, 3
    %p143 = pnand %p141, %p142
    %p144 = pneg %p143
    // Predicated region
    $region25: #{tpu_custom_call.1} parent=5 // pred_check
      _
    $region26: #{tpu_custom_call.1} parent=5 // pred_check_branch
      %146 = sbr.rel (%p143) target = $region28
    $region27: #{tpu_custom_call.1} parent=5 // pred_region
      %s147 = ssub.s32 %s8, 1
      %s148 = smul.u32 32, %s18
      %p149 = scmp.lt.s32.totalorder %s17, 1
      %s150 = scalar_select %p149, %s17, 1
      %p151 = scmp.lt.s32.totalorder %s148, 31
      %s152 = scalar_select %p151, %s148, 31
      %s153 = smul.addr %s150, 32
      %s154 = sadd.s32 %s152, %s153
      %s155 = smul.addr %s154, 4
      %s156 = scalar_lea.vmem %s0, %s155
      %p157 = pneg %p48
      %p158 = pneg %p45
      %s159 = smul.u32 2, %s18
      %p160 = scmp.lt.s32.totalorder %s159, 1
      %s161 = scalar_select %p160, %s159, 1
      %s162 = smul.addr %s161, 4
      %s163 = scalar_lea.vmem %s1, %s162
      %p164 = pneg %p74
      %p165 = pneg %p71
      %p166 = pneg %p100
      %p167 = pneg %p97
      %p168 = scmp.lt.s32.totalorder %s17, 1
      %s169 = scalar_select %p168, %s17, 1
      %s170 = smul.addr %s169, 8
      %s171 = smul.addr %s170, 8
      %s172 = scalar_lea.vmem %s2, %s171
      %s173 = smul.u32 32, %s18
      %p174 = scmp.lt.s32.totalorder %s17, 1
      %s175 = scalar_select %p174, %s17, 1
      %p176 = scmp.lt.s32.totalorder %s173, 31
      %s177 = scalar_select %p176, %s173, 31
      %s178 = smul.addr %s175, 32
      %s179 = sadd.s32 %s177, %s178
      %s180 = smul.addr %s179, 4
      %s181 = scalar_lea.vmem %s0, %s180
      %s182 = smul.u32 32, %s18
      %s183 = smul.u32 2, %s18
      %p184 = scmp.lt.s32.totalorder %s183, 1
      %s185 = scalar_select %p184, %s183, 1
      %s186 = smul.addr %s185, 4
      %s187 = scalar_lea.vmem %s1, %s186
      %s188 = smul.u32 2, %s18
      %p189 = scmp.lt.s32.totalorder %s17, 1
      %s190 = scalar_select %p189, %s17, 1
      %s191 = smul.addr %s190, 8
      %s192 = smul.addr %s191, 8
      %s193 = scalar_lea.vmem %s2, %s192
      %p195 = scmp.eq.s32.totalorder %s18, 0
      // Predicated region
      $region29: #{tpu_custom_call.1} parent=27 // pred_check
        %p196 = pneg %p195
      $region30: #{tpu_custom_call.1} parent=27 // pred_check_branch
        %198 = sbr.rel (%p196) target = $region32
      $region31: #{tpu_custom_call.1} parent=27 // pred_region
        %vm199 = vcmask 31744
        %200 = vst.msk [vmem:[%s193] sm:$0xff] %vm199, 0.0
        %201 = vst.msk [vmem:[%s193 + $0x8] sm:$0xff] %vm199, 0.0
        %202 = vst.msk [vmem:[%s193 + $0x10] sm:$0xff] %vm199, 0.0
        %203 = vst.msk [vmem:[%s193 + $0x18] sm:$0xff] %vm199, 0.0
        %204 = vst.msk [vmem:[%s193 + $0x20] sm:$0xff] %vm199, 0.0
        %205 = vst.msk [vmem:[%s193 + $0x28] sm:$0xff] %vm199, 0.0
        %206 = vst.msk [vmem:[%s193 + $0x30] sm:$0xff] %vm199, 0.0
        %207 = vst.msk [vmem:[%s193 + $0x38] sm:$0xff] %vm199, 0.0
      $region32: #{tpu_custom_call.1} parent=27 // pred_fallthru
        _
      %v208 = vld [vmem:[%s193] sm:$0xff]
      %v209 = vld [vmem:[%s193 + $0x8] sm:$0xff]
      %v210 = vld [vmem:[%s193 + $0x10] sm:$0xff]
      %v211 = vld [vmem:[%s193 + $0x18] sm:$0xff]
      %v212 = vld [vmem:[%s193 + $0x20] sm:$0xff]
      %v213 = vld [vmem:[%s193 + $0x28] sm:$0xff]
      %v214 = vld [vmem:[%s193 + $0x30] sm:$0xff]
      %v215 = vld [vmem:[%s193 + $0x38] sm:$0xff]
      %v216 = vld [vmem:[%s187] sm:$0xff]
      %v217 = vld [vmem:[%s187 + $0x8] sm:$0xff]
      %v218 = vld [vmem:[%s187 + $0x10] sm:$0xff]
      %v219 = vld [vmem:[%s187 + $0x18] sm:$0xff]
      %v220 = vld [vmem:[%s187 + $0x20] sm:$0xff]
      %v221 = vld [vmem:[%s187 + $0x28] sm:$0xff]
      %v222 = vld [vmem:[%s187 + $0x30] sm:$0xff]
      %v223 = vld [vmem:[%s187 + $0x38] sm:$0xff]
      %v224 = vld [vmem:[%s181] sm:$0xf]
      %v225 = vld [vmem:[%s181 + $0x4] sm:$0xf]
      %v226 = vld [vmem:[%s181 + $0x8] sm:$0xf]
      %v227 = vld [vmem:[%s181 + $0xc] sm:$0xf]
      %v228 = vld [vmem:[%s181 + $0x10] sm:$0xf]
      %v229 = vld [vmem:[%s181 + $0x14] sm:$0xf]
      %v230 = vld [vmem:[%s181 + $0x18] sm:$0xf]
      %v231 = vld [vmem:[%s181 + $0x1c] sm:$0xf]
      %v232 = vld [vmem:[%s181 + $0x20] sm:$0xf]
      %v233 = vld [vmem:[%s181 + $0x24] sm:$0xf]
      %v234 = vld [vmem:[%s181 + $0x28] sm:$0xf]
      %v235 = vld [vmem:[%s181 + $0x2c] sm:$0xf]
      %v236 = vld [vmem:[%s181 + $0x30] sm:$0xf]
      %v237 = vld [vmem:[%s181 + $0x34] sm:$0xf]
      %v238 = vld [vmem:[%s181 + $0x38] sm:$0xf]
      %v239 = vld [vmem:[%s181 + $0x3c] sm:$0xf]
      %v240 = vld [vmem:[%s181 + $0x40] sm:$0xf]
      %v241 = vld [vmem:[%s181 + $0x44] sm:$0xf]
      %v242 = vld [vmem:[%s181 + $0x48] sm:$0xf]
      %v243 = vld [vmem:[%s181 + $0x4c] sm:$0xf]
      %v244 = vld [vmem:[%s181 + $0x50] sm:$0xf]
      %v245 = vld [vmem:[%s181 + $0x54] sm:$0xf]
      %v246 = vld [vmem:[%s181 + $0x58] sm:$0xf]
      %v247 = vld [vmem:[%s181 + $0x5c] sm:$0xf]
      %v248 = vld [vmem:[%s181 + $0x60] sm:$0xf]
      %v249 = vld [vmem:[%s181 + $0x64] sm:$0xf]
      %v250 = vld [vmem:[%s181 + $0x68] sm:$0xf]
      %v251 = vld [vmem:[%s181 + $0x6c] sm:$0xf]
      %v252 = vld [vmem:[%s181 + $0x70] sm:$0xf]
      %v253 = vld [vmem:[%s181 + $0x74] sm:$0xf]
      %v254 = vld [vmem:[%s181 + $0x78] sm:$0xf]
      %v255 = vld [vmem:[%s181 + $0x7c] sm:$0xf]
      %v264 = vunpack.c.l.b16 %v216
      %v265 = vunpack.c.h.b16 %v216
      %v266 = vunpack.c.l.b16 %v217
      %v267 = vunpack.c.h.b16 %v217
      %v268 = vunpack.c.l.b16 %v218
      %v269 = vunpack.c.h.b16 %v218
      %v270 = vunpack.c.l.b16 %v219
      %v271 = vunpack.c.h.b16 %v219
      %v272 = vunpack.c.l.b16 %v220
      %v273 = vunpack.c.h.b16 %v220
      %v274 = vunpack.c.l.b16 %v221
      %v275 = vunpack.c.h.b16 %v221
      %v276 = vunpack.c.l.b16 %v222
      %v277 = vunpack.c.h.b16 %v222
      %v278 = vunpack.c.l.b16 %v223
      %v279 = vunpack.c.h.b16 %v223
      %v280 = vpack.c.b16 %v266, %v264
      %v281 = vpack.c.b16 %v267, %v265
      %v282 = vpack.c.b16 %v270, %v268
      %v283 = vpack.c.b16 %v271, %v269
      %v284 = vpack.c.b16 %v274, %v272
      %v285 = vpack.c.b16 %v275, %v273
      %v286 = vpack.c.b16 %v278, %v276
      %v287 = vpack.c.b16 %v279, %v277
      %v328 = vunpack.c.l.b16 %v224
      %v329 = vunpack.c.l.b16 %v225
      %v330 = vunpack.c.l.b16 %v226
      %v331 = vunpack.c.l.b16 %v227
      %v332 = vunpack.c.l.b16 %v228
      %v333 = vunpack.c.l.b16 %v229
      %v334 = vunpack.c.l.b16 %v230
      %v335 = vunpack.c.l.b16 %v231
      %v336 = vunpack.c.l.b16 %v232
      %v337 = vunpack.c.l.b16 %v233
      %v338 = vunpack.c.l.b16 %v234
      %v339 = vunpack.c.l.b16 %v235
      %v340 = vunpack.c.l.b16 %v236
      %v341 = vunpack.c.l.b16 %v237
      %v342 = vunpack.c.l.b16 %v238
      %v343 = vunpack.c.l.b16 %v239
      %v344 = vunpack.c.l.b16 %v240
      %v345 = vunpack.c.l.b16 %v241
      %v346 = vunpack.c.l.b16 %v242
      %v347 = vunpack.c.l.b16 %v243
      %v348 = vunpack.c.l.b16 %v244
      %v349 = vunpack.c.l.b16 %v245
      %v350 = vunpack.c.l.b16 %v246
      %v351 = vunpack.c.l.b16 %v247
      %v352 = vunpack.c.l.b16 %v248
      %v353 = vunpack.c.l.b16 %v249
      %v354 = vunpack.c.l.b16 %v250
      %v355 = vunpack.c.l.b16 %v251
      %v356 = vunpack.c.l.b16 %v252
      %v357 = vunpack.c.l.b16 %v253
      %v358 = vunpack.c.l.b16 %v254
      %v359 = vunpack.c.l.b16 %v255
      %v360 = vpack.c.b16 %v329, %v328
      %v361 = vpack.c.b16 %v331, %v330
      %v362 = vpack.c.b16 %v333, %v332
      %v363 = vpack.c.b16 %v335, %v334
      %v364 = vpack.c.b16 %v337, %v336
      %v365 = vpack.c.b16 %v339, %v338
      %v366 = vpack.c.b16 %v341, %v340
      %v367 = vpack.c.b16 %v343, %v342
      %v368 = vpack.c.b16 %v345, %v344
      %v369 = vpack.c.b16 %v347, %v346
      %v370 = vpack.c.b16 %v349, %v348
      %v371 = vpack.c.b16 %v351, %v350
      %v372 = vpack.c.b16 %v353, %v352
      %v373 = vpack.c.b16 %v355, %v354
      %v374 = vpack.c.b16 %v357, %v356
      %v375 = vpack.c.b16 %v359, %v358
      %392 = vmatprep.subr.bf16.mxu0 0
      %393 = vmatpush1.bf16.msra.mxu0 %v367
      %394 = vmatprep.subr.bf16.mxu0 0
      %395 = vmatpush1.bf16.msra.mxu0 %v366
      %396 = vmatprep.subr.bf16.mxu0 0
      %397 = vmatpush1.bf16.msra.mxu0 %v365
      %398 = vmatprep.subr.bf16.mxu0 0
      %399 = vmatpush1.bf16.msra.mxu0 %v364
      %400 = vmatprep.subr.bf16.mxu0 0
      %401 = vmatpush1.bf16.msra.mxu0 %v363
      %402 = vmatprep.subr.bf16.mxu0 0
      %403 = vmatpush1.bf16.msra.mxu0 %v362
      %404 = vmatprep.subr.bf16.mxu0 0
      %405 = vmatpush1.bf16.msra.mxu0 %v361
      %406 = vmatprep.subr.bf16.mxu0 0
      %407 = vmatpush1.bf16.msra.mxu0 %v360
      %408 = vmatprep.subr.bf16.mxu0 0
      %409 = vmatpush2.bf16.msra.mxu0 %v375
      %410 = vmatprep.subr.bf16.mxu0 0
      %411 = vmatpush2.bf16.msra.mxu0 %v374
      %412 = vmatprep.subr.bf16.mxu0 0
      %413 = vmatpush2.bf16.msra.mxu0 %v373
      %414 = vmatprep.subr.bf16.mxu0 0
      %415 = vmatpush2.bf16.msra.mxu0 %v372
      %416 = vmatprep.subr.bf16.mxu0 0
      %417 = vmatpush2.bf16.msra.mxu0 %v371
      %418 = vmatprep.subr.bf16.mxu0 0
      %419 = vmatpush2.bf16.msra.mxu0 %v370
      %420 = vmatprep.subr.bf16.mxu0 0
      %421 = vmatpush2.bf16.msra.mxu0 %v369
      %422 = vmatprep.subr.bf16.mxu0 0
      %423 = vmatpush2.bf16.msra.mxu0 %v368
      %424 = vmatprep.mubr.bf16.mxu0 %v281
      %425 = vmatmul.mubr.bf16.gmra.mxu0 %v280
      %v426 = vpop.f32.mrf.mxu0
      %v427 = vadd.f32 0.0, %v426
      %v428 = vpop.f32.mrf.mxu0
      %v429 = vpop.f32.mrf.mxu0
      %v430 = vadd.f32 0.0, %v429
      %v431 = vpop.f32.mrf.mxu0
      %432 = vmatprep.mubr.bf16.mxu0 %v283
      %433 = vmatmul.mubr.bf16.gmra.mxu0 %v282
      %v434 = vpop.f32.mrf.mxu0
      %v435 = vadd.f32 0.0, %v434
      %v436 = vpop.f32.mrf.mxu0
      %v437 = vpop.f32.mrf.mxu0
      %v438 = vadd.f32 0.0, %v437
      %v439 = vpop.f32.mrf.mxu0
      %440 = vmatprep.mubr.bf16.mxu0 %v285
      %441 = vmatmul.mubr.bf16.gmra.mxu0 %v284
      %v442 = vpop.f32.mrf.mxu0
      %v443 = vadd.f32 0.0, %v442
      %v444 = vpop.f32.mrf.mxu0
      %v445 = vpop.f32.mrf.mxu0
      %v446 = vadd.f32 0.0, %v445
      %v447 = vpop.f32.mrf.mxu0
      %448 = vmatprep.mubr.bf16.mxu0 %v287
      %449 = vmatmul.mubr.bf16.gmra.mxu0 %v286
      %v450 = vpop.f32.mrf.mxu0
      %v451 = vadd.f32 0.0, %v450
      %v452 = vpop.f32.mrf.mxu0
      %v453 = vpop.f32.mrf.mxu0
      %v454 = vadd.f32 0.0, %v453
      %v455 = vpop.f32.mrf.mxu0
      %456 = vdwg.mxu0
      %v457 = vadd.f32 %v208, %v427
      %v458 = vadd.f32 %v209, %v430
      %v459 = vadd.f32 %v210, %v435
      %v460 = vadd.f32 %v211, %v438
      %v461 = vadd.f32 %v212, %v443
      %v462 = vadd.f32 %v213, %v446
      %v463 = vadd.f32 %v214, %v451
      %v464 = vadd.f32 %v215, %v454
      %vm465 = vcmask 31744
      %466 = vst.msk [vmem:[%s193] sm:$0xff] %vm465, %v457
      %467 = vst.msk [vmem:[%s193 + $0x8] sm:$0xff] %vm465, %v458
      %468 = vst.msk [vmem:[%s193 + $0x10] sm:$0xff] %vm465, %v459
      %469 = vst.msk [vmem:[%s193 + $0x18] sm:$0xff] %vm465, %v460
      %470 = vst.msk [vmem:[%s193 + $0x20] sm:$0xff] %vm465, %v461
      %471 = vst.msk [vmem:[%s193 + $0x28] sm:$0xff] %vm465, %v462
      %472 = vst.msk [vmem:[%s193 + $0x30] sm:$0xff] %vm465, %v463
      %473 = vst.msk [vmem:[%s193 + $0x38] sm:$0xff] %vm465, %v464
      %p474 = scmp.lt.s32.totalorder %s17, 1
      %s475 = scalar_select %p474, %s17, 1
      %s476 = smul.addr %s475, 8
      %s477 = smul.addr %s476, 8
      %s478 = scalar_lea.vmem %s2, %s477
      // Predicated region
      $region33: #{tpu_custom_call.1} parent=27 // pred_check
        %p479 = pneg %p97
      $region34: #{tpu_custom_call.1} parent=27 // pred_check_branch
        %481 = sbr.rel (%p479) target = $region36
      $region35: #{tpu_custom_call.1} parent=27 // pred_region
        _
      $region36: #{tpu_custom_call.1} parent=27 // pred_fallthru
        _
    $region28: #{tpu_custom_call.1} parent=5 // pred_fallthru
      _
    %p482 = scmp.le.s32.totalorder 2, %s8
    // Predicated region
    $region37: #{tpu_custom_call.1} parent=5 // pred_check
      %p483 = pneg %p482
    $region38: #{tpu_custom_call.1} parent=5 // pred_check_branch
      %485 = sbr.rel (%p483) target = $region40
    $region39: #{tpu_custom_call.1} parent=5 // pred_region
      %s486 = ssub.s32 %s8, 2
      // Predicated region
      $region41: #{tpu_custom_call.1} parent=39 // pred_check
        %p487 = pneg %p103
      $region42: #{tpu_custom_call.1} parent=39 // pred_check_branch
        %489 = sbr.rel (%p487) target = $region44
      $region43: #{tpu_custom_call.1} parent=39 // pred_region
        %p490 = scmp.lt.s32.totalorder %s19, 1
        %s491 = scalar_select %p490, %s19, 1
        %s492 = smul.addr %s491, 8
        %s493 = smul.addr %s492, 8
        %s494 = scalar_lea.vmem %s2, %s493
      $region44: #{tpu_custom_call.1} parent=39 // pred_fallthru
        _
    $region40: #{tpu_custom_call.1} parent=5 // pred_fallthru
      _
  $region6: #{tpu_custom_call.1} parent=0 // loop_footer
    %s12 = sadd.s32 1, %s8
  $region7: #{tpu_custom_call.1} parent=0 // loop_footer_branch
    %7 = sbr.rel target = $region3
  $region8: #{tpu_custom_call.1} parent=0 // loop_exit
    _

</llo_original>
